<compile_context>
chip_gen: v6e
topology: v6e:2x2x1
jax: 0.10.0
libtpu: 0.0.40
codegen_flags: <defaults>
</compile_context>

<pallas_src>
import functools

import jax
import jax.numpy as jnp
from jax import lax
from jax.experimental import pallas as pl
from jax.experimental.pallas import tpu as pltpu


def _updater_kernel(changes_ref, mem_ref, wcomb_ref, bcomb_ref, bfix_ref,
                    we_ref, be_ref, out_ref,
                    *, norm: bool, constrain_amp: bool):
    """One recurrent Updater step per grid iteration; memory lives in out_ref."""
    B, Cc, N = changes_ref.shape
    M = out_ref.shape[-1] // 2
    t = pl.program_id(0)

    # Initialize the resident memory state from the (aliased) packed memory input.
    @pl.when(t == 0)
    def _():
        out_ref[...] = mem_ref[...]

    mem = out_ref[...]                                                    # (B, 2M) packed [re | im]
    angle = jnp.arctan2(mem[:, M:], mem[:, :M])                           # torch.angle == atan2(im, re)

    changes = changes_ref[...]                                            # (B, Cc, N)  NCL

    if norm:
        # z only needed for the channel-norm; its output contribution is pre-fused
        # into W_comb / b_comb on the host.
        z = jnp.dot(angle, we_ref[...],
                    preferred_element_type=jnp.float32) + be_ref[...]     # (B, Z)
        # per-position L2 over the (virtual) concat channel dim.
        ss = (jnp.sum(changes * changes, axis=1)                          # (B, N)
              + jnp.sum(z * z, axis=-1, keepdims=True))                   # + (B, 1)
        inv = lax.rsqrt(jnp.maximum(ss, 1e-24))                           # 1/max(||.||,1e-12)
        ch_sum = jnp.sum(changes * inv[:, None, :], axis=-1)              # (B, Cc)
        s_b = jnp.sum(inv, axis=-1, keepdims=True)                        # (B, 1)
        cat = jnp.concatenate([ch_sum, angle * s_b], axis=1)              # (B, Cc+M)
        summed = (jnp.dot(cat, wcomb_ref[...],
                          preferred_element_type=jnp.float32)
                  + s_b * bcomb_ref[...] + bfix_ref[...])                 # (B, 2M)
    else:
        ch_sum = jnp.sum(changes, axis=-1)                                # (B, Cc)
        cat = jnp.concatenate([ch_sum, angle * jnp.float32(N)], axis=1)   # (B, Cc+M)
        summed = (jnp.dot(cat, wcomb_ref[...],
                          preferred_element_type=jnp.float32)
                  + bfix_ref[...])                                        # (B, 2M)

    new_mem = mem + summed                                                # packed: no channel-split needed

    if constrain_amp:
        # memory / |memory| (matches PyTorch: no epsilon -> NaN/Inf if |.| == 0)
        re_n = new_mem[:, :M]
        im_n = new_mem[:, M:]
        inv_amp = lax.rsqrt(re_n * re_n + im_n * im_n)                    # (B, M)
        new_mem = new_mem * jnp.concatenate([inv_amp, inv_amp], axis=1)   # (B, 2M)

    out_ref[...] = new_mem


def updater_forward(changes, mem_re, mem_im, we, be, wn, bn,
                    *, norm=False, constrain_amp=False):
    """Run T recurrent Updater steps in a single pallas_call.

    changes : (T, B, Cc, N) or (B, Cc, N) float32 (native PyTorch NCL layout)
    memory  : split real/imag (B, M) float32
    encoder : we (M, Z), be (1, Z)        -> z = angle @ we + be
    network : wn (Cc+Z, 2M), bn (1, 2M)   -> Conv1d k=1 as per-position matmul
    Returns the updated memory as (new_re, new_im), each (B, M).
    """
    if changes.ndim == 3:
        changes = changes[None]
    T, B, Cc, N = changes.shape
    M = mem_re.shape[1]
    Z = we.shape[1]

    changes = changes.astype(jnp.float32)
    mem_packed = jnp.concatenate([mem_re, mem_im], axis=1).astype(jnp.float32)   # (B, 2M)

    # Host-side pre-fusion of encoder into the network weight:
    #   z_eff @ Wn_z == (s_b * angle) @ (We @ Wn_z) + s_b * (be @ Wn_z)
    wn_ch = wn[:Cc, :]                                                    # (Cc, 2M)
    wn_z = wn[Cc:, :]                                                     # (Z,  2M)
    w_comb = jnp.concatenate([wn_ch, we @ wn_z], axis=0).astype(jnp.float32)      # (Cc+M, 2M)
    b_comb = (be @ wn_z).astype(jnp.float32)                              # (1, 2M)
    if norm:
        b_fixed = (jnp.float32(N) * bn).astype(jnp.float32)               # s_b * b_comb added in-kernel
    else:
        b_fixed = (jnp.float32(N) * (b_comb + bn)).astype(jnp.float32)    # fully folded (s_b == N)

    kernel = functools.partial(_updater_kernel, norm=norm,
                               constrain_amp=constrain_amp)

    grid_spec = pltpu.PrefetchScalarGridSpec(
        num_scalar_prefetch=0,
        grid=(T,),
        in_specs=[
            pl.BlockSpec((None, B, Cc, N), lambda t: (t, 0, 0, 0)),  # per-step changes tile
            pl.BlockSpec((B, 2 * M), lambda t: (0, 0)),              # packed memory (resident)
            pl.BlockSpec((Cc + M, 2 * M), lambda t: (0, 0)),         # fused weight (resident)
            pl.BlockSpec((1, 2 * M), lambda t: (0, 0)),              # b_comb
            pl.BlockSpec((1, 2 * M), lambda t: (0, 0)),              # b_fixed
            pl.BlockSpec((M, Z), lambda t: (0, 0)),                  # encoder W (norm=True only)
            pl.BlockSpec((1, Z), lambda t: (0, 0)),                  # encoder b (norm=True only)
        ],
        out_specs=pl.BlockSpec((B, 2 * M), lambda t: (0, 0)),        # same block each t -> resident
    )

    new_mem = pl.pallas_call(
        kernel,
        grid_spec=grid_spec,
        out_shape=jax.ShapeDtypeStruct((B, 2 * M), jnp.float32),
        # Update memory in place: packed memory input -> packed memory output.
        input_output_aliases={1: 0},
        compiler_params=pltpu.CompilerParams(
            dimension_semantics=("arbitrary",),
            vmem_limit_bytes=32 * 1024 * 1024,
        ),
    )(changes, mem_packed, w_comb, b_comb, b_fixed, we, be)

    return new_mem[:, :M], new_mem[:, M:]


def _reference_step(changes_bcn, mem_re, mem_im, we, be, wn, bn,
                    *, norm, constrain_amp):
    """Pure-JAX reference mirroring one PyTorch Updater.forward step."""
    B, Cc, N = changes_bcn.shape
    M = mem_re.shape[1]
    angle = jnp.arctan2(mem_im, mem_re)
    z = angle @ we + be[0]                                            # (B, Z)
    z_exp = jnp.broadcast_to(z[:, :, None], (B, z.shape[1], N))
    out = jnp.concatenate([changes_bcn, z_exp], axis=1)               # (B, C_in, N)
    if norm:
        nrm = jnp.sqrt(jnp.sum(out * out, axis=1, keepdims=True))
        out = out / jnp.maximum(nrm, 1e-12)
    net = jnp.einsum('co,bcn->bon', wn, out) + bn[0][None, :, None]   # (B, 2M, N)
    upd_re = jnp.sum(net[:, :M, :], axis=2)
    upd_im = jnp.sum(net[:, M:, :], axis=2)
    new_re = mem_re + upd_re
    new_im = mem_im + upd_im
    if constrain_amp:
        amp = jnp.sqrt(new_re ** 2 + new_im ** 2)
        new_re = new_re / amp
        new_im = new_im / amp
    return new_re, new_im


if __name__ == "__main__":
    # Small, forward-consistent shapes; T recurrent steps fused into one kernel call.
    T, B, Cc, N = 4, 2, 8, 8    # changes: (T, B, C_changes, N)
    M = 16                      # complex memory channels
    Z = 16                      # encoder latent size
    Cin = Cc + Z                # network input channels
    Cout = 2 * M                # network output channels (real+imag)

    key = jax.random.PRNGKey(0)
    k = jax.random.split(key, 7)

    changes = jax.random.normal(k[0], (T, B, Cc, N), dtype=jnp.float32)
    mem_re = jax.random.normal(k[1], (B, M), dtype=jnp.float32)
    mem_im = jax.random.normal(k[2], (B, M), dtype=jnp.float32)

    # Synthetic parameters (encoder: Linear(M->Z); network: Conv1d(Cin->2M, k=1)).
    we = jax.random.normal(k[3], (M, Z), dtype=jnp.float32) * 0.1
    be = jax.random.normal(k[4], (1, Z), dtype=jnp.float32) * 0.1
    wn = jax.random.normal(k[5], (Cin, Cout), dtype=jnp.float32) * 0.1
    bn = jax.random.normal(k[6], (1, Cout), dtype=jnp.float32) * 0.1

    ok = True
    for norm, constrain_amp in [(True, True), (False, False)]:
        # Reference: T sequential PyTorch-equivalent steps (computed before the
        # kernel call, which aliases/donates the packed memory buffer).
        ref_re, ref_im = mem_re, mem_im
        for t in range(T):
            ref_re, ref_im = _reference_step(changes[t], ref_re, ref_im,
                                             we, be, wn, bn,
                                             norm=norm, constrain_amp=constrain_amp)
        jax.block_until_ready((ref_re, ref_im))

        out_re, out_im = updater_forward(changes, mem_re, mem_im, we, be, wn, bn,
                                         norm=norm, constrain_amp=constrain_amp)
        jax.block_until_ready((out_re, out_im))

        # N-sum hoist / encoder pre-fusion / rsqrt change the FP summation order
        # vs PyTorch -> small drift, amplified slightly over T recurrent steps.
        ok &= bool(jnp.allclose(out_re, ref_re, atol=2e-3, rtol=2e-3))
        ok &= bool(jnp.allclose(out_im, ref_im, atol=2e-3, rtol=2e-3))

    assert ok

    # TODO(synk): `convert_to_complex` is not defined in the PyTorch source; assumed
    # channels [0:M] -> real and [M:2M] -> imag of the network output.
    print("KERNEL_OK")
</pallas_src>

<mosaic_0001>
module attributes {stable_mosaic.version = 11 : i64} {
  func.func @_updater_kernel(%arg0: i32, %arg1: memref<1x2x8x8xf32, #tpu.memory_space<vmem>>, %arg2: memref<2x32xf32, #tpu.memory_space<vmem>>, %arg3: memref<24x32xf32, #tpu.memory_space<vmem>>, %arg4: memref<1x32xf32, #tpu.memory_space<vmem>>, %arg5: memref<1x32xf32, #tpu.memory_space<vmem>>, %arg6: memref<16x16xf32, #tpu.memory_space<vmem>>, %arg7: memref<1x16xf32, #tpu.memory_space<vmem>>, %arg8: memref<2x32xf32, #tpu.memory_space<vmem>>) attributes {dimension_semantics = [#tpu.dimension_semantics<arbitrary>], iteration_bounds = array<i64: 4>, scalar_prefetch = 0 : i64, scratch_operands = 0 : i64, tpu.core_type = #tpu.core_type<tc>, window_params = [{transform_indices = @transform_0, window_bounds = array<i64: 1, 2, 8, 8>}, {pipeline_mode = #tpu.pipeline_mode<synchronous>, transform_indices = @transform_1, window_bounds = array<i64: 2, 32>}, {pipeline_mode = #tpu.pipeline_mode<synchronous>, transform_indices = @transform_2, window_bounds = array<i64: 24, 32>}, {pipeline_mode = #tpu.pipeline_mode<synchronous>, transform_indices = @transform_3, window_bounds = array<i64: 1, 32>}, {pipeline_mode = #tpu.pipeline_mode<synchronous>, transform_indices = @transform_4, window_bounds = array<i64: 1, 32>}, {pipeline_mode = #tpu.pipeline_mode<synchronous>, transform_indices = @transform_5, window_bounds = array<i64: 16, 16>}, {pipeline_mode = #tpu.pipeline_mode<synchronous>, transform_indices = @transform_6, window_bounds = array<i64: 1, 16>}, {pipeline_mode = #tpu.pipeline_mode<synchronous>, transform_indices = @transform_7, window_bounds = array<i64: 2, 32>}]} {
    %c0_i32 = arith.constant 0 : i32
    %0 = arith.cmpi eq, %arg0, %c0_i32 : i32
    %1 = arith.extui %0 : i1 to i32
    %c0_i32_0 = arith.constant 0 : i32
    %2 = arith.cmpi ne, %1, %c0_i32_0 : i32
    scf.if %2 {
      %c0_24 = arith.constant 0 : index
      %c0_25 = arith.constant 0 : index
      %53 = vector.load %arg2[%c0_24, %c0_25] : memref<2x32xf32, #tpu.memory_space<vmem>>, vector<2x32xf32>
      %c0_26 = arith.constant 0 : index
      %c0_27 = arith.constant 0 : index
      %54 = vector.load %arg8[%c0_26, %c0_27] : memref<2x32xf32, #tpu.memory_space<vmem>>, vector<2x32xf32>
      tpu.vector_store %arg8[%c0_26, %c0_27], %53 {strides = array<i32>} : memref<2x32xf32, #tpu.memory_space<vmem>>, vector<2x32xf32>,
    } else {
    }
    %c0 = arith.constant 0 : index
    %c0_1 = arith.constant 0 : index
    %3 = vector.load %arg8[%c0, %c0_1] : memref<2x32xf32, #tpu.memory_space<vmem>>, vector<2x32xf32>
    %4 = vector.extract_strided_slice %3 {offsets = [0, 16], sizes = [2, 16], strides = [1, 1]} : vector<2x32xf32> to vector<2x16xf32>
    %5 = vector.extract_strided_slice %3 {offsets = [0, 0], sizes = [2, 16], strides = [1, 1]} : vector<2x32xf32> to vector<2x16xf32>
    %6 = math.atan2 %4, %5 : vector<2x16xf32>
    %c0_2 = arith.constant 0 : index
    %c0_3 = arith.constant 0 : index
    %c0_4 = arith.constant 0 : index
    %c0_5 = arith.constant 0 : index
    %7 = vector.load %arg1[%c0_2, %c0_3, %c0_4, %c0_5] : memref<1x2x8x8xf32, #tpu.memory_space<vmem>>, vector<1x2x8x8xf32>
    %8 = vector.shape_cast %7 : vector<1x2x8x8xf32> to vector<2x8x8xf32>
    %c0_6 = arith.constant 0 : index
    %c0_7 = arith.constant 0 : index
    %9 = vector.load %arg6[%c0_6, %c0_7] : memref<16x16xf32, #tpu.memory_space<vmem>>, vector<16x16xf32>
    %cst = arith.constant dense<0.000000e+00> : vector<2x16xf32>
    %10 = tpu.matmul %6, %9, %cst {dimension_numbers = #tpu.dot_dimension_numbers<[1], [0], [0], [1], [0, 0, 1, 1], [], []>} : vector<2x16xf32>, vector<16x16xf32>, vector<2x16xf32> -> vector<2x16xf32>
    %c0_8 = arith.constant 0 : index
    %c0_9 = arith.constant 0 : index
    %11 = vector.load %arg7[%c0_8, %c0_9] : memref<1x16xf32, #tpu.memory_space<vmem>>, vector<1x16xf32>
    %12 = vector.broadcast %11 : vector<1x16xf32> to vector<2x16xf32>
    %13 = arith.addf %10, %12 : vector<2x16xf32>
    %14 = arith.mulf %8, %8 : vector<2x8x8xf32>
    %cst_10 = arith.constant dense<0.000000e+00> : vector<2x8xf32>
    %15 = vector.multi_reduction <add>, %14, %cst_10 [1] : vector<2x8x8xf32> to vector<2x8xf32>
    %16 = arith.mulf %13, %13 : vector<2x16xf32>
    %cst_11 = arith.constant dense<0.000000e+00> : vector<2xf32>
    %17 = vector.multi_reduction <add>, %16, %cst_11 [1] : vector<2x16xf32> to vector<2xf32>
    %18 = vector.shape_cast %17 : vector<2xf32> to vector<2x1xf32>
    %19 = vector.broadcast %18 : vector<2x1xf32> to vector<2x8xf32>
    %20 = arith.addf %15, %19 : vector<2x8xf32>
    %cst_12 = arith.constant 1.000000e-24 : f32
    %21 = vector.broadcast %cst_12 : f32 to vector<2x8xf32>
    %22 = arith.maximumf %20, %21 : vector<2x8xf32>
    %23 = math.rsqrt %22 : vector<2x8xf32>
    %24 = vector.shape_cast %23 : vector<2x8xf32> to vector<2x1x8xf32>
    %25 = vector.broadcast %24 : vector<2x1x8xf32> to vector<2x8x8xf32>
    %26 = arith.mulf %8, %25 : vector<2x8x8xf32>
    %cst_13 = arith.constant dense<0.000000e+00> : vector<2x8xf32>
    %27 = vector.multi_reduction <add>, %26, %cst_13 [2] : vector<2x8x8xf32> to vector<2x8xf32>
    %cst_14 = arith.constant dense<0.000000e+00> : vector<2xf32>
    %28 = vector.multi_reduction <add>, %23, %cst_14 [1] : vector<2x8xf32> to vector<2xf32>
    %29 = vector.shape_cast %28 : vector<2xf32> to vector<2x1xf32>
    %30 = vector.broadcast %29 : vector<2x1xf32> to vector<2x16xf32>
    %31 = arith.mulf %6, %30 : vector<2x16xf32>
    %32 = tpu.concatenate %27, %31 in 1 : vector<2x8xf32>, vector<2x16xf32> -> vector<2x24xf32>
    %c0_15 = arith.constant 0 : index
    %c0_16 = arith.constant 0 : index
    %33 = vector.load %arg3[%c0_15, %c0_16] : memref<24x32xf32, #tpu.memory_space<vmem>>, vector<24x32xf32>
    %cst_17 = arith.constant dense<0.000000e+00> : vector<2x32xf32>
    %34 = tpu.matmul %32, %33, %cst_17 {dimension_numbers = #tpu.dot_dimension_numbers<[1], [0], [0], [1], [0, 0, 1, 1], [], []>} : vector<2x24xf32>, vector<24x32xf32>, vector<2x32xf32> -> vector<2x32xf32>
    %c0_18 = arith.constant 0 : index
    %c0_19 = arith.constant 0 : index
    %35 = vector.load %arg4[%c0_18, %c0_19] : memref<1x32xf32, #tpu.memory_space<vmem>>, vector<1x32xf32>
    %36 = vector.broadcast %29 : vector<2x1xf32> to vector<2x32xf32>
    %37 = vector.broadcast %35 : vector<1x32xf32> to vector<2x32xf32>
    %38 = arith.mulf %36, %37 : vector<2x32xf32>
    %39 = arith.addf %34, %38 : vector<2x32xf32>
    %c0_20 = arith.constant 0 : index
    %c0_21 = arith.constant 0 : index
    %40 = vector.load %arg5[%c0_20, %c0_21] : memref<1x32xf32, #tpu.memory_space<vmem>>, vector<1x32xf32>
    %41 = vector.broadcast %40 : vector<1x32xf32> to vector<2x32xf32>
    %42 = arith.addf %39, %41 : vector<2x32xf32>
    %43 = arith.addf %3, %42 : vector<2x32xf32>
    %44 = vector.extract_strided_slice %43 {offsets = [0, 0], sizes = [2, 16], strides = [1, 1]} : vector<2x32xf32> to vector<2x16xf32>
    %45 = vector.extract_strided_slice %43 {offsets = [0, 16], sizes = [2, 16], strides = [1, 1]} : vector<2x32xf32> to vector<2x16xf32>
    %46 = arith.mulf %44, %44 : vector<2x16xf32>
    %47 = arith.mulf %45, %45 : vector<2x16xf32>
    %48 = arith.addf %46, %47 : vector<2x16xf32>
    %49 = math.rsqrt %48 : vector<2x16xf32>
    %50 = tpu.concatenate %49, %49 in 1 : vector<2x16xf32>, vector<2x16xf32> -> vector<2x32xf32>
    %51 = arith.mulf %43, %50 : vector<2x32xf32>
    %c0_22 = arith.constant 0 : index
    %c0_23 = arith.constant 0 : index
    %52 = vector.load %arg8[%c0_22, %c0_23] : memref<2x32xf32, #tpu.memory_space<vmem>>, vector<2x32xf32>
    tpu.vector_store %arg8[%c0_22, %c0_23], %51 {strides = array<i32>} : memref<2x32xf32, #tpu.memory_space<vmem>>, vector<2x32xf32>,
    return
  }
  func.func @transform_0(%arg0: i32) -> (i32, i32, i32, i32) {
    %c0_i32 = arith.constant 0 : i32
    %c0_i32_0 = arith.constant 0 : i32
    %c0_i32_1 = arith.constant 0 : i32
    %c0_i32_2 = arith.constant 0 : i32
    return %arg0, %c0_i32, %c0_i32_0, %c0_i32_1 : i32, i32, i32, i32
  }
  func.func @transform_1(%arg0: i32) -> (i32, i32) {
    %c0_i32 = arith.constant 0 : i32
    %c0_i32_0 = arith.constant 0 : i32
    %c0_i32_1 = arith.constant 0 : i32
    return %c0_i32, %c0_i32_0 : i32, i32
  }
  func.func @transform_2(%arg0: i32) -> (i32, i32) {
    %c0_i32 = arith.constant 0 : i32
    %c0_i32_0 = arith.constant 0 : i32
    %c0_i32_1 = arith.constant 0 : i32
    return %c0_i32, %c0_i32_0 : i32, i32
  }
  func.func @transform_3(%arg0: i32) -> (i32, i32) {
    %c0_i32 = arith.constant 0 : i32
    %c0_i32_0 = arith.constant 0 : i32
    %c0_i32_1 = arith.constant 0 : i32
    return %c0_i32, %c0_i32_0 : i32, i32
  }
  func.func @transform_4(%arg0: i32) -> (i32, i32) {
    %c0_i32 = arith.constant 0 : i32
    %c0_i32_0 = arith.constant 0 : i32
    %c0_i32_1 = arith.constant 0 : i32
    return %c0_i32, %c0_i32_0 : i32, i32
  }
  func.func @transform_5(%arg0: i32) -> (i32, i32) {
    %c0_i32 = arith.constant 0 : i32
    %c0_i32_0 = arith.constant 0 : i32
    %c0_i32_1 = arith.constant 0 : i32
    return %c0_i32, %c0_i32_0 : i32, i32
  }
  func.func @transform_6(%arg0: i32) -> (i32, i32) {
    %c0_i32 = arith.constant 0 : i32
    %c0_i32_0 = arith.constant 0 : i32
    %c0_i32_1 = arith.constant 0 : i32
    return %c0_i32, %c0_i32_0 : i32, i32
  }
  func.func @transform_7(%arg0: i32) -> (i32, i32) {
    %c0_i32 = arith.constant 0 : i32
    %c0_i32_0 = arith.constant 0 : i32
    %c0_i32_1 = arith.constant 0 : i32
    return %c0_i32, %c0_i32_0 : i32, i32
  }
}

</mosaic_0001>

<llo_original>
// kernel: tpu_custom_call.1
$region0: #{tpu_custom_call.1}
  #allocation0 [shape = 'u32[]', space=smem, size = 0x4, offset = 0x4, fixed_abs, tag = 'smem constant byte address 0x4 - core index']
  #allocation1 [shape = 'u32[144,128]{1,0:T(1,128)}', space=vmem, size = 0x12000, scoped, tag = 'internal scratch']
  %s0 = inlined_call_operand.hbm [shape: f32[4,2,8,8], index: 0, kind: input, shape index: {}]
  %s1 = inlined_call_operand.hbm [shape: f32[2,32], index: 1, kind: input, shape index: {}, may-alias: {1,7}]
  %s2 = inlined_call_operand.hbm [shape: f32[24,32], index: 2, kind: input, shape index: {}]
  %s3 = inlined_call_operand.vmem [shape: f32[1,32], index: 3, kind: input, shape index: {}]
  %s4 = inlined_call_operand.vmem [shape: f32[1,32], index: 4, kind: input, shape index: {}]
  %s5 = inlined_call_operand.hbm [shape: f32[16,16], index: 5, kind: input, shape index: {}]
  %s6 = inlined_call_operand.vmem [shape: f32[1,16], index: 6, kind: input, shape index: {}]
  %s7 = inlined_call_operand.hbm [shape: f32[2,32], index: 7, kind: output, shape index: {}, may-alias: {1,7}]
  %s8 = sld [smem:[#allocation0]]
  $region81: #{tpu_custom_call.1} parent=0
    _
  %s10 = ssub.s32 1, %s8
  %s11 = scalar_select 0, %s10, %s8
  $region1: #{tpu_custom_call.1} parent=0
    #allocation2 [shape = 'u8[16384]{0}', space=vmem, size = 0x4000, scoped, tag = 'input window, operand 0']
    #allocation3 [shape = 's32[2]{0}', space=sflag, size = 0x8, scoped, tag = 'scoped memory for tpu_custom_call.1']
    #allocation4 [shape = 's32[2]{0}', space=sflag, size = 0x8, scoped, tag = 'scoped memory for tpu_custom_call.1']
    #allocation5 [shape = 'u8[1024]{0}', space=vmem, size = 0x400, scoped, tag = 'input window, operand 1, single buffered']
    #allocation6 [shape = 's32[1]{0}', space=sflag, size = 0x4, scoped, tag = 'scoped memory for tpu_custom_call.1']
    #allocation7 [shape = 'u8[12288]{0}', space=vmem, size = 0x3000, scoped, tag = 'input window, operand 2, single buffered']
    #allocation8 [shape = 'u8[8192]{0}', space=vmem, size = 0x2000, scoped, tag = 'input window, operand 5, single buffered']
    #allocation9 [shape = 's32[1]{0}', space=sflag, size = 0x4, scoped, tag = 'scoped memory for tpu_custom_call.1']
    #allocation10 [shape = 'u8[1024]{0}', space=vmem, size = 0x400, scoped, tag = 'output window, operand 0, single buffered']
    %12 = vsyncpa [#allocation3], 0
    %s13 = scalar_lea.sflag [#allocation3], 1
    %14 = vsyncpa %s13, 0
    %15 = vsyncpa [#allocation6], 0
    %16 = vsyncpa [#allocation9], 0
    %17 = vsyncpa [#allocation4], 0
    loop: start=0, step=1, limit=6
    $region2: #{tpu_custom_call.1} parent=1 // loop_pre_header
      _
    $region3: #{tpu_custom_call.1} parent=1 // loop_header
      %s19 = sphi 0, %s23
      %p20 = scmp.ge.s32.totalorder %s19, 6
      %s29 = sphi 0, %s31
      %s32 = sphi 0, %s29
      %s33 = sphi 0, %s32
      %s49 = sphi 0, %s33
      %s53 = sphi 0, %s53
      %s55 = sphi 0, %s53
      %s56 = sphi 0, %s55
      %s70 = sphi 0, %s56
      %s74 = sphi 0, %s74
      %s76 = sphi 0, %s74
      %s77 = sphi 0, %s76
      %s91 = sphi 0, %s77
      %s95 = sphi 0, %s95
      %s97 = sphi 0, %s95
      %s98 = sphi 0, %s97
      %s112 = sphi 0, %s98
      %s116 = sphi 0, %s116
      %s118 = sphi 0, %s116
      %s119 = sphi 0, %s118
      %s133 = sphi 0, %s119
      %s137 = sphi 0, %s137
      %s139 = sphi 0, %s137
      %s140 = sphi 0, %s139
      %s154 = sphi 0, %s140
      %s158 = sphi 0, %s158
      %s160 = sphi 0, %s158
      %s161 = sphi 0, %s160
      %s175 = sphi 0, %s161
      %s179 = sphi 0, %s179
      %s181 = sphi 0, %s179
      %s182 = sphi 0, %s181
      %s196 = sphi 0, %s182
    $region4: #{tpu_custom_call.1} parent=1 // loop_header_branch
      %22 = sbr.rel (%p20) target = $region8
    $region5: #{tpu_custom_call.1} parent=1 // loop_body
      %s24 = ssub.s32 %s19, 1
      %s25 = ssub.s32 %s19, 2
      %s26 = sadd.s32 %s19, 1
      %s27 = ssub.s32 %s19, %s26
      %p28 = scmp.eq.s32.totalorder %s27, 0
      %s30 = sadd.s32 %s29, 1
      %s31 = scalar_select %p28, %s29, %s30
      %p34 = pneg %p28
      %p35 = scmp.eq.s32.totalorder %s19, 3
      %p36 = por %p34, %p35
      %p37 = scmp.ne.s32.totalorder %s29, %s32
      %p38 = scmp.eq.s32.totalorder %s19, 0
      %p39 = por %p37, %p38
      %p40 = scmp.ne.s32.totalorder %s29, %s32
      %p41 = scmp.eq.s32.totalorder %s24, 3
      %p42 = por %p40, %p41
      %p43 = scmp.ne.s32.totalorder %s32, %s33
      %p44 = scmp.eq.s32.totalorder %s24, 0
      %p45 = por %p43, %p44
      %p46 = scmp.ne.s32.totalorder %s32, %s33
      %p47 = scmp.eq.s32.totalorder %s25, 3
      %p48 = por %p46, %p47
      %p50 = scmp.ne.s32.totalorder %s33, %s49
      %p51 = scmp.eq.s32.totalorder %s25, 0
      %p52 = por %p50, %p51
      %s54 = sadd.s32 %s53, 1
      %p57 = scmp.eq.s32.totalorder %s19, 3
      %p58 = scmp.ne.s32.totalorder %s53, %s55
      %p59 = scmp.eq.s32.totalorder %s19, 0
      %p60 = por %p58, %p59
      %p61 = scmp.ne.s32.totalorder %s53, %s55
      %p62 = scmp.eq.s32.totalorder %s24, 3
      %p63 = por %p61, %p62
      %p64 = scmp.ne.s32.totalorder %s55, %s56
      %p65 = scmp.eq.s32.totalorder %s24, 0
      %p66 = por %p64, %p65
      %p67 = scmp.ne.s32.totalorder %s55, %s56
      %p68 = scmp.eq.s32.totalorder %s25, 3
      %p69 = por %p67, %p68
      %p71 = scmp.ne.s32.totalorder %s56, %s70
      %p72 = scmp.eq.s32.totalorder %s25, 0
      %p73 = por %p71, %p72
      %s75 = sadd.s32 %s74, 1
      %p78 = scmp.eq.s32.totalorder %s19, 3
      %p79 = scmp.ne.s32.totalorder %s74, %s76
      %p80 = scmp.eq.s32.totalorder %s19, 0
      %p81 = por %p79, %p80
      %p82 = scmp.ne.s32.totalorder %s74, %s76
      %p83 = scmp.eq.s32.totalorder %s24, 3
      %p84 = por %p82, %p83
      %p85 = scmp.ne.s32.totalorder %s76, %s77
      %p86 = scmp.eq.s32.totalorder %s24, 0
      %p87 = por %p85, %p86
      %p88 = scmp.ne.s32.totalorder %s76, %s77
      %p89 = scmp.eq.s32.totalorder %s25, 3
      %p90 = por %p88, %p89
      %p92 = scmp.ne.s32.totalorder %s77, %s91
      %p93 = scmp.eq.s32.totalorder %s25, 0
      %p94 = por %p92, %p93
      %s96 = sadd.s32 %s95, 1
      %p99 = scmp.eq.s32.totalorder %s19, 3
      %p100 = scmp.ne.s32.totalorder %s95, %s97
      %p101 = scmp.eq.s32.totalorder %s19, 0
      %p102 = por %p100, %p101
      %p103 = scmp.ne.s32.totalorder %s95, %s97
      %p104 = scmp.eq.s32.totalorder %s24, 3
      %p105 = por %p103, %p104
      %p106 = scmp.ne.s32.totalorder %s97, %s98
      %p107 = scmp.eq.s32.totalorder %s24, 0
      %p108 = por %p106, %p107
      %p109 = scmp.ne.s32.totalorder %s97, %s98
      %p110 = scmp.eq.s32.totalorder %s25, 3
      %p111 = por %p109, %p110
      %p113 = scmp.ne.s32.totalorder %s98, %s112
      %p114 = scmp.eq.s32.totalorder %s25, 0
      %p115 = por %p113, %p114
      %s117 = sadd.s32 %s116, 1
      %p120 = scmp.eq.s32.totalorder %s19, 3
      %p121 = scmp.ne.s32.totalorder %s116, %s118
      %p122 = scmp.eq.s32.totalorder %s19, 0
      %p123 = por %p121, %p122
      %p124 = scmp.ne.s32.totalorder %s116, %s118
      %p125 = scmp.eq.s32.totalorder %s24, 3
      %p126 = por %p124, %p125
      %p127 = scmp.ne.s32.totalorder %s118, %s119
      %p128 = scmp.eq.s32.totalorder %s24, 0
      %p129 = por %p127, %p128
      %p130 = scmp.ne.s32.totalorder %s118, %s119
      %p131 = scmp.eq.s32.totalorder %s25, 3
      %p132 = por %p130, %p131
      %p134 = scmp.ne.s32.totalorder %s119, %s133
      %p135 = scmp.eq.s32.totalorder %s25, 0
      %p136 = por %p134, %p135
      %s138 = sadd.s32 %s137, 1
      %p141 = scmp.eq.s32.totalorder %s19, 3
      %p142 = scmp.ne.s32.totalorder %s137, %s139
      %p143 = scmp.eq.s32.totalorder %s19, 0
      %p144 = por %p142, %p143
      %p145 = scmp.ne.s32.totalorder %s137, %s139
      %p146 = scmp.eq.s32.totalorder %s24, 3
      %p147 = por %p145, %p146
      %p148 = scmp.ne.s32.totalorder %s139, %s140
      %p149 = scmp.eq.s32.totalorder %s24, 0
      %p150 = por %p148, %p149
      %p151 = scmp.ne.s32.totalorder %s139, %s140
      %p152 = scmp.eq.s32.totalorder %s25, 3
      %p153 = por %p151, %p152
      %p155 = scmp.ne.s32.totalorder %s140, %s154
      %p156 = scmp.eq.s32.totalorder %s25, 0
      %p157 = por %p155, %p156
      %s159 = sadd.s32 %s158, 1
      %p162 = scmp.eq.s32.totalorder %s19, 3
      %p163 = scmp.ne.s32.totalorder %s158, %s160
      %p164 = scmp.eq.s32.totalorder %s19, 0
      %p165 = por %p163, %p164
      %p166 = scmp.ne.s32.totalorder %s158, %s160
      %p167 = scmp.eq.s32.totalorder %s24, 3
      %p168 = por %p166, %p167
      %p169 = scmp.ne.s32.totalorder %s160, %s161
      %p170 = scmp.eq.s32.totalorder %s24, 0
      %p171 = por %p169, %p170
      %p172 = scmp.ne.s32.totalorder %s160, %s161
      %p173 = scmp.eq.s32.totalorder %s25, 3
      %p174 = por %p172, %p173
      %p176 = scmp.ne.s32.totalorder %s161, %s175
      %p177 = scmp.eq.s32.totalorder %s25, 0
      %p178 = por %p176, %p177
      %s180 = sadd.s32 %s179, 1
      %p183 = scmp.eq.s32.totalorder %s19, 3
      %p184 = scmp.ne.s32.totalorder %s179, %s181
      %p185 = scmp.eq.s32.totalorder %s19, 0
      %p186 = por %p184, %p185
      %p187 = scmp.ne.s32.totalorder %s179, %s181
      %p188 = scmp.eq.s32.totalorder %s24, 3
      %p189 = por %p187, %p188
      %p190 = scmp.ne.s32.totalorder %s181, %s182
      %p191 = scmp.eq.s32.totalorder %s24, 0
      %p192 = por %p190, %p191
      %p193 = scmp.ne.s32.totalorder %s181, %s182
      %p194 = scmp.eq.s32.totalorder %s25, 3
      %p195 = por %p193, %p194
      %p197 = scmp.ne.s32.totalorder %s182, %s196
      %p198 = scmp.eq.s32.totalorder %s25, 0
      %p199 = por %p197, %p198
      %p200 = scmp.le.s32.totalorder 1, %s19
      %p201 = scmp.lt.s32.totalorder %s19, 5
      %p202 = pnand %p200, %p201
      %p203 = pneg %p202
      // Predicated region
      $region9: #{tpu_custom_call.1} parent=5 // pred_check
        _
      $region10: #{tpu_custom_call.1} parent=5 // pred_check_branch
        %205 = sbr.rel (%p202) target = $region12
      $region11: #{tpu_custom_call.1} parent=5 // pred_region
        %s206 = ssub.s32 %s19, 1
        // Predicated region
        $region13: #{tpu_custom_call.1} parent=11 // pred_check
          %p207 = pneg %p66
        $region14: #{tpu_custom_call.1} parent=11 // pred_check_branch
          %209 = sbr.rel (%p207) target = $region16
        $region15: #{tpu_custom_call.1} parent=11 // pred_region
          %s211 = ssub.s32 32, 32
          %212 = vsyncadd [#allocation6], %s211
          %s214 = sshll.u32 [#allocation5], 4
          %s215 = int_to_ptr.vmem [resolvable:$true] %s214
          %217 = dma.hbm_to_vmem [thread:$0]  %s1, 32, %s215, [#allocation6]
        $region16: #{tpu_custom_call.1} parent=11 // pred_fallthru
          _
        // Predicated region
        $region17: #{tpu_custom_call.1} parent=11 // pred_check
          %p218 = pneg %p87
        $region18: #{tpu_custom_call.1} parent=11 // pred_check_branch
          %220 = sbr.rel (%p218) target = $region20
        $region19: #{tpu_custom_call.1} parent=11 // pred_region
          %s222 = ssub.s32 384, 384
          %223 = vsyncadd [#allocation6], %s222
          %s224 = sshll.u32 [#allocation7], 4
          %s225 = int_to_ptr.vmem [resolvable:$true] %s224
          %230 = dma.hbm_to_vmem [thread:$0]  %s2, 384, %s225, [#allocation6], 128, 128, 8
        $region20: #{tpu_custom_call.1} parent=11 // pred_fallthru
          _
        // Predicated region
        $region21: #{tpu_custom_call.1} parent=11 // pred_check
          %p231 = pneg %p108
        $region22: #{tpu_custom_call.1} parent=11 // pred_check_branch
          %233 = sbr.rel (%p231) target = $region24
        $region23: #{tpu_custom_call.1} parent=11 // pred_region
          _
        $region24: #{tpu_custom_call.1} parent=11 // pred_fallthru
          _
        // Predicated region
        $region25: #{tpu_custom_call.1} parent=11 // pred_check
          %p234 = pneg %p129
        $region26: #{tpu_custom_call.1} parent=11 // pred_check_branch
          %236 = sbr.rel (%p234) target = $region28
        $region27: #{tpu_custom_call.1} parent=11 // pred_region
          _
        $region28: #{tpu_custom_call.1} parent=11 // pred_fallthru
          _
        // Predicated region
        $region29: #{tpu_custom_call.1} parent=11 // pred_check
          %p237 = pneg %p150
        $region30: #{tpu_custom_call.1} parent=11 // pred_check_branch
          %239 = sbr.rel (%p237) target = $region32
        $region31: #{tpu_custom_call.1} parent=11 // pred_region
          %s241 = ssub.s32 256, 256
          %242 = vsyncadd [#allocation9], %s241
          %s243 = sshll.u32 [#allocation8], 4
          %s244 = int_to_ptr.vmem [resolvable:$true] %s243
          %249 = dma.hbm_to_vmem [thread:$0]  %s5, 256, %s244, [#allocation9], 128, 128, 8
        $region32: #{tpu_custom_call.1} parent=11 // pred_fallthru
          _
        // Predicated region
        $region33: #{tpu_custom_call.1} parent=11 // pred_check
          %p250 = pneg %p171
        $region34: #{tpu_custom_call.1} parent=11 // pred_check_branch
          %252 = sbr.rel (%p250) target = $region36
        $region35: #{tpu_custom_call.1} parent=11 // pred_region
          _
        $region36: #{tpu_custom_call.1} parent=11 // pred_fallthru
          _
      $region12: #{tpu_custom_call.1} parent=5 // pred_fallthru
        _
      %p253 = scmp.lt.s32.totalorder %s19, 4
      // Predicated region
      $region37: #{tpu_custom_call.1} parent=5 // pred_check
        %p254 = pneg %p253
      $region38: #{tpu_custom_call.1} parent=5 // pred_check_branch
        %256 = sbr.rel (%p254) target = $region40
      $region39: #{tpu_custom_call.1} parent=5 // pred_region
        // Predicated region
        $region41: #{tpu_custom_call.1} parent=39 // pred_check
          %p257 = pneg %p39
        $region42: #{tpu_custom_call.1} parent=39 // pred_check_branch
          %259 = sbr.rel (%p257) target = $region44
        $region43: #{tpu_custom_call.1} parent=39 // pred_region
          %s260 = sand.u32 %s29, 1
          %s261 = scalar_lea.sflag [#allocation3], %s260
          %s262 = sand.u32 %s29, 1
          %s263 = smul.addr %s262, 16
          %s264 = scalar_lea.vmem [#allocation2], %s263
          %s266 = ssub.s32 256, 256
          %267 = vsyncadd %s261, %s266
          %s268 = smul.addr %s19, 2
          %s269 = smul.addr %s268, 128
          %s270 = scalar_lea.hbm %s0, %s269
          %s271 = sshll.u32 %s264, 4
          %s272 = int_to_ptr.vmem [resolvable:$true] %s271
          %277 = dma.hbm_to_vmem [thread:$0]  %s270, 256, %s272, %s261, 128, 128, 8
        $region44: #{tpu_custom_call.1} parent=39 // pred_fallthru
          _
      $region40: #{tpu_custom_call.1} parent=5 // pred_fallthru
        _
      %p278 = scmp.le.s32.totalorder 1, %s19
      %p279 = scmp.lt.s32.totalorder %s19, 5
      %p280 = pnand %p278, %p279
      %p281 = pneg %p280
      // Predicated region
      $region45: #{tpu_custom_call.1} parent=5 // pred_check
        _
      $region46: #{tpu_custom_call.1} parent=5 // pred_check_branch
        %283 = sbr.rel (%p280) target = $region48
      $region47: #{tpu_custom_call.1} parent=5 // pred_region
        %s284 = ssub.s32 %s19, 1
        %s285 = sand.u32 %s32, 1
        %s286 = scalar_lea.sflag [#allocation3], %s285
        %s287 = sand.u32 %s32, 1
        %s288 = smul.addr %s287, 16
        %s289 = scalar_lea.vmem [#allocation2], %s288
        // Predicated region
        $region49: #{tpu_custom_call.1} parent=47 // pred_check
          %p290 = pneg %p45
        $region50: #{tpu_custom_call.1} parent=47 // pred_check_branch
          %292 = sbr.rel (%p290) target = $region52
        $region51: #{tpu_custom_call.1} parent=47 // pred_region
          %293 = dma.done %s286, 256
        $region52: #{tpu_custom_call.1} parent=47 // pred_fallthru
          _
        // Predicated region
        $region53: #{tpu_custom_call.1} parent=47 // pred_check
          %p294 = pneg %p66
        $region54: #{tpu_custom_call.1} parent=47 // pred_check_branch
          %296 = sbr.rel (%p294) target = $region56
        $region55: #{tpu_custom_call.1} parent=47 // pred_region
          %297 = dma.done [#allocation6], 32
        $region56: #{tpu_custom_call.1} parent=47 // pred_fallthru
          _
        // Predicated region
        $region57: #{tpu_custom_call.1} parent=47 // pred_check
          %p298 = pneg %p87
        $region58: #{tpu_custom_call.1} parent=47 // pred_check_branch
          %300 = sbr.rel (%p298) target = $region60
        $region59: #{tpu_custom_call.1} parent=47 // pred_region
          %301 = dma.done [#allocation6], 384
        $region60: #{tpu_custom_call.1} parent=47 // pred_fallthru
          _
        // Predicated region
        $region61: #{tpu_custom_call.1} parent=47 // pred_check
          %p302 = pneg %p150
        $region62: #{tpu_custom_call.1} parent=47 // pred_check_branch
          %304 = sbr.rel (%p302) target = $region64
        $region63: #{tpu_custom_call.1} parent=47 // pred_region
          %305 = dma.done [#allocation9], 256
        $region64: #{tpu_custom_call.1} parent=47 // pred_fallthru
          _
        %s306 = sand.u32 %s32, 1
        %s307 = scalar_lea.sflag [#allocation3], %s306
        %s308 = sand.u32 %s32, 1
        %s309 = smul.addr %s308, 16
        %s310 = scalar_lea.vmem [#allocation2], %s309
        %p311 = pneg %p45
        %p312 = pneg %p42
        %p313 = pneg %p66
        %p314 = pneg %p63
        %p315 = pneg %p87
        %p316 = pneg %p84
        %p317 = pneg %p108
        %p318 = pneg %p105
        %p319 = pneg %p129
        %p320 = pneg %p126
        %p321 = pneg %p150
        %p322 = pneg %p147
        %p323 = pneg %p171
        %p324 = pneg %p168
        %p325 = pneg %p192
        %p326 = pneg %p189
        %p327 = scmp.eq.s32.totalorder %s24, 0
        // Predicated region
        $region65: #{tpu_custom_call.1} parent=47 // pred_check
          %p328 = pneg %p327
        $region66: #{tpu_custom_call.1} parent=47 // pred_check_branch
          %330 = sbr.rel (%p328) target = $region68
        $region67: #{tpu_custom_call.1} parent=47 // pred_region
          %v331 = vld [vmem:[#allocation5] sm:$0x3]
          %vm332 = vcmask 254976
          %333 = vst.msk [vmem:[#allocation10] sm:$0x3] %vm332, %v331
        $region68: #{tpu_custom_call.1} parent=47 // pred_fallthru
          _
        %v334 = vld [vmem:[#allocation10] sm:$0x3]
        %336 = vrot.lane.b32.xlu0 %v334, 16
        %v337 = vpop.permute.xlu0 %336
        %v339 = vand.u32 2147483647, %v337
        %v340 = vand.u32 2147483647, %v334
        %v341 = vmin.f32 %v339, %v340
        %v342 = vmax.f32 %v339, %v340
        %v343 = vrcp.pop %v342
        %v344 = vmul.f32 %v341, %v343
        %v345 = vmul.f32 %v344, %v344
        %v346 = vmul.f32 0.002785687, %v345
        %v347 = vadd.f32 %v346, -0.015866
        %v348 = vmul.f32 %v347, %v345
        %v349 = vadd.f32 %v348, 0.04247222
        %v350 = vmul.f32 %v349, %v345
        %v351 = vadd.f32 %v350, -0.074975304
        %v352 = vmul.f32 %v351, %v345
        %v353 = vadd.f32 %v352, 0.1064488
        %v354 = vmul.f32 %v353, %v345
        %v355 = vadd.f32 %v354, -0.14207031
        %v356 = vmul.f32 %v355, %v345
        %v357 = vadd.f32 %v356, 0.19993454
        %v358 = vmul.f32 %v357, %v345
        %v359 = vadd.f32 %v358, -0.33333147
        %v360 = vmul.f32 %v359, %v345
        %v361 = vmul.f32 %v360, %v344
        %v362 = vadd.f32 %v361, %v344
        %vm363 = vcmp.gt.f32.partialorder %v340, %v339
        %v364 = vsub.f32 1.5707964, %v362
        %v365 = vsel %vm363, %v364, %v362
        %vm366 = vcmp.lt.f32.partialorder %v337, 0.0
        %v367 = vsub.f32 3.1415927, %v365
        %v368 = vsel %vm366, %v367, %v365
        %vm369 = vcmp.lt.s32.totalorder %v337, 0
        %v370 = vsel %vm369, 3.1415927, 0.0
        %vm371 = vcmp.eq.f32.partialorder %v334, 0.0
        %v372 = vsel %vm371, %v370, %v368
        %vm373 = vcmp.ne.f32.partialorder %v337, %v337
        %vm374 = vcmp.ne.f32.partialorder %v334, %v334
        %vm375 = vmor %vm373, %vm374
        %v376 = vsel %vm375, nan, %v372
        %vm377 = vcmp.lt.f32.partialorder %v337, 0.0
        %v378 = vsel %vm377, 2.3561945, 0.7853982
        %vm379 = vcmp.eq.s32.totalorder %v339, inf
        %vm380 = vcmp.eq.s32.totalorder %v340, inf
        %vm381 = vmand %vm379, %vm380
        %v382 = vsel %vm381, %v378, %v376
        %v383 = vand.u32 2147483647, %v382
        %v384 = vand.u32 %v334, 2147483648
        %v385 = vor.u32 %v383, %v384
        %v386 = vld [vmem:[%s289] sm:$0xff]
        %v387 = vld [vmem:[%s289 + $0x8] sm:$0xff]
        %v388 = vld [vmem:[#allocation8] sm:$0xff]
        %v389 = vld [vmem:[#allocation8 + $0x8] sm:$0xff]
        %v390 = vld [vmem:[%s6] sm:$0x1]
        %v392 = vlaneseq
        %v393 = vshrl.u32 %v392, 7
        %v394 = vsub.s32 0, %v393
        %v395 = vrot.slane %v390, %v394
        %398 = vrot.lane.b32.xlu0 %v385, 112
        %v399 = vpop.permute.xlu0 %398
        %vm400 = vcmask 130048
        %v401 = vsel %vm400, %v399, 0
        %403 = vmatprep.subr.mxu0 0.0
        %404 = vmatpush1.msra.mxu0 0.0
        %405 = vmatprep.subr.mxu0 0.0
        %406 = vmatpush1.msra.mxu0 0.0
        %407 = vmatprep.subr.mxu0 0.0
        %408 = vmatpush1.msra.mxu0 0.0
        %409 = vmatprep.subr.mxu0 0.0
        %410 = vmatpush1.msra.mxu0 0.0
        %411 = vmatprep.subr.mxu0 0.0
        %412 = vmatpush1.msra.mxu0 0.0
        %413 = vmatprep.subr.mxu0 0.0
        %414 = vmatpush1.msra.mxu0 0.0
        %415 = vmatprep.subr.mxu0 0.0
        %416 = vmatpush1.msra.mxu0 0.0
        %417 = vmatprep.subr.mxu0 0.0
        %418 = vmatpush1.msra.mxu0 0.0
        %419 = vmatprep.subr.mxu0 0.0
        %420 = vmatpush1.msra.mxu0 0.0
        %421 = vmatprep.subr.mxu0 0.0
        %422 = vmatpush1.msra.mxu0 0.0
        %423 = vmatprep.subr.mxu0 0.0
        %424 = vmatpush1.msra.mxu0 0.0
        %425 = vmatprep.subr.mxu0 0.0
        %426 = vmatpush1.msra.mxu0 0.0
        %427 = vmatprep.subr.mxu0 0.0
        %428 = vmatpush1.msra.mxu0 0.0
        %429 = vmatprep.subr.mxu0 0.0
        %430 = vmatpush1.msra.mxu0 0.0
        %431 = vmatprep.subr.mxu0 0.0
        %432 = vmatpush1.msra.mxu0 %v389
        %433 = vmatprep.subr.mxu0 0.0
        %434 = vmatpush1.msra.mxu0 %v388
        %435 = vmatprep.subr.mxu0 0.0
        %436 = vmatpush2.msra.mxu0 0.0
        %437 = vmatprep.subr.mxu0 0.0
        %438 = vmatpush2.msra.mxu0 0.0
        %439 = vmatprep.subr.mxu0 0.0
        %440 = vmatpush2.msra.mxu0 0.0
        %441 = vmatprep.subr.mxu0 0.0
        %442 = vmatpush2.msra.mxu0 0.0
        %443 = vmatprep.subr.mxu0 0.0
        %444 = vmatpush2.msra.mxu0 0.0
        %445 = vmatprep.subr.mxu0 0.0
        %446 = vmatpush2.msra.mxu0 0.0
        %447 = vmatprep.subr.mxu0 0.0
        %448 = vmatpush2.msra.mxu0 0.0
        %449 = vmatprep.subr.mxu0 0.0
        %450 = vmatpush2.msra.mxu0 0.0
        %451 = vmatprep.subr.mxu0 0.0
        %452 = vmatpush2.msra.mxu0 0.0
        %453 = vmatprep.subr.mxu0 0.0
        %454 = vmatpush2.msra.mxu0 0.0
        %455 = vmatprep.subr.mxu0 0.0
        %456 = vmatpush2.msra.mxu0 0.0
        %457 = vmatprep.subr.mxu0 0.0
        %458 = vmatpush2.msra.mxu0 0.0
        %459 = vmatprep.subr.mxu0 0.0
        %460 = vmatpush2.msra.mxu0 0.0
        %461 = vmatprep.subr.mxu0 0.0
        %462 = vmatpush2.msra.mxu0 0.0
        %463 = vmatprep.subr.mxu0 0.0
        %464 = vmatpush2.msra.mxu0 0.0
        %465 = vmatprep.subr.mxu0 0.0
        %466 = vmatpush2.msra.mxu0 0.0
        %467 = vmatprep.mubr.f32.mxu0 0.0
        %468 = vmatmul.mubr.f32.gmra.mxu0 %v401
        %v469 = vpop.f32.mrf.mxu0
        %v470 = vadd.f32 %v395, %v469
        %v471 = vpop.f32.mrf.mxu0
        %472 = vdwg.mxu0
        %v473 = vmul.f32 %v386, %v386
        %v474 = vmul.f32 %v387, %v387
        %vm475 = vcmask 64512
        %v476 = vsel %vm475, %v473, 0.0
        %v477 = vrot.slane %v476, 4
        %v478 = vadd.f32 %v476, %v477
        %v479 = vrot.slane %v478, 2
        %v480 = vadd.f32 %v478, %v479
        %v481 = vrot.slane %v480, 1
        %v482 = vadd.f32 %v480, %v481
        %v483 = vsel %vm475, %v474, 0.0
        %v484 = vrot.slane %v483, 4
        %v485 = vadd.f32 %v483, %v484
        %v486 = vrot.slane %v485, 2
        %v487 = vadd.f32 %v485, %v486
        %v488 = vrot.slane %v487, 1
        %v489 = vadd.f32 %v487, %v488
        %v490 = vmul.f32 %v470, %v470
        %vm491 = vcmask 123904
        %v492 = vsel %vm491, %v490, 0.0
        %493 = vadd.xlane.f32.xlu0 %v492
        %v494 = vpop.xlane.xlu0 %493
        %v496 = vrot.slane %v494, 1
        %v499 = vadd.f32 %v482, %v494
        %v500 = vadd.f32 %v489, %v496
        %v501 = vmax.f32 %v499, 1e-24
        %v502 = vmax.f32 %v500, 1e-24
        %v503 = vrsqrt.pop %v501
        %v504 = vrsqrt.pop %v502
        %v505 = vlaneseq
        %v506 = vshrl.u32 %v505, 7
        %v507 = vsub.s32 0, %v506
        %v508 = vrot.slane %v503, %v507
        %v509 = vlaneseq
        %v510 = vshrl.u32 %v509, 7
        %v511 = vsub.s32 0, %v510
        %v512 = vrot.slane %v504, %v511
        %v513 = vmul.f32 %v386, %v508
        %v514 = vmul.f32 %v387, %v512
        %v515 = vsel %vm475, %v513, 0.0
        %516 = vadd.xlane.f32.xlu0 %v515
        %v517 = vpop.xlane.xlu0 %516
        %v518 = vsel %vm475, %v514, 0.0
        %519 = vadd.xlane.f32.xlu0 %v518
        %v520 = vpop.xlane.xlu0 %519
        %v523 = vrot.slane %v504, 7
        %vm524 = vcmask 1041409
        %v525 = vsel %vm524, %v523, %v503
        %vm527 = vcmask 58368
        %v528 = vsel %vm527, %v525, 0.0
        %529 = vadd.xlane.f32.xlu0 %v528
        %v530 = vpop.xlane.xlu0 %529
        %v531 = vmul.f32 %v385, %v530
        %v534 = vlaneseq
        %v535 = vand.u32 %v534, 127
        %v536 = vlaneseq
        %v537 = vshrl.u32 %v536, 7
        %v538 = vsub.s32 %v535, %v537
        %v539 = vrot.slane %v517, %v538
        %v540 = vlaneseq
        %v541 = vshrl.u32 %v540, 7
        %v542 = vsub.s32 %v535, %v541
        %v543 = vrot.slane %v520, %v542
        %v544 = vsel %vm524, %v543, %v539
        %547 = vrot.lane.b32.xlu0 %v531, 120
        %v548 = vpop.permute.xlu0 %547
        %v550 = vsel %vm475, %v544, %v548
        %v551 = vld [vmem:[#allocation7] sm:$0xff]
        %v552 = vld [vmem:[#allocation7 + $0x8] sm:$0xff]
        %v553 = vld [vmem:[#allocation7 + $0x10] sm:$0xff]
        %v554 = vld [vmem:[%s3] sm:$0x1]
        %v556 = vlaneseq
        %v557 = vshrl.u32 %v556, 7
        %v558 = vsub.s32 0, %v557
        %v559 = vrot.slane %v554, %v558
        %v561 = vmul.f32 %v530, %v559
        %vm562 = vcmask 195584
        %v564 = vsel %vm562, %v550, 0
        %566 = vmatprep.subr.mxu0 0.0
        %567 = vmatpush1.msra.mxu0 0.0
        %568 = vmatprep.subr.mxu0 0.0
        %569 = vmatpush1.msra.mxu0 0.0
        %570 = vmatprep.subr.mxu0 0.0
        %571 = vmatpush1.msra.mxu0 0.0
        %572 = vmatprep.subr.mxu0 0.0
        %573 = vmatpush1.msra.mxu0 0.0
        %574 = vmatprep.subr.mxu0 0.0
        %575 = vmatpush1.msra.mxu0 0.0
        %576 = vmatprep.subr.mxu0 0.0
        %577 = vmatpush1.msra.mxu0 0.0
        %578 = vmatprep.subr.mxu0 0.0
        %579 = vmatpush1.msra.mxu0 0.0
        %580 = vmatprep.subr.mxu0 0.0
        %581 = vmatpush1.msra.mxu0 0.0
        %582 = vmatprep.subr.mxu0 0.0
        %583 = vmatpush1.msra.mxu0 0.0
        %584 = vmatprep.subr.mxu0 0.0
        %585 = vmatpush1.msra.mxu0 0.0
        %586 = vmatprep.subr.mxu0 0.0
        %587 = vmatpush1.msra.mxu0 0.0
        %588 = vmatprep.subr.mxu0 0.0
        %589 = vmatpush1.msra.mxu0 0.0
        %590 = vmatprep.subr.mxu0 0.0
        %591 = vmatpush1.msra.mxu0 0.0
        %592 = vmatprep.subr.mxu0 0.0
        %593 = vmatpush1.msra.mxu0 %v553
        %594 = vmatprep.subr.mxu0 0.0
        %595 = vmatpush1.msra.mxu0 %v552
        %596 = vmatprep.subr.mxu0 0.0
        %597 = vmatpush1.msra.mxu0 %v551
        %598 = vmatprep.subr.mxu0 0.0
        %599 = vmatpush2.msra.mxu0 0.0
        %600 = vmatprep.subr.mxu0 0.0
        %601 = vmatpush2.msra.mxu0 0.0
        %602 = vmatprep.subr.mxu0 0.0
        %603 = vmatpush2.msra.mxu0 0.0
        %604 = vmatprep.subr.mxu0 0.0
        %605 = vmatpush2.msra.mxu0 0.0
        %606 = vmatprep.subr.mxu0 0.0
        %607 = vmatpush2.msra.mxu0 0.0
        %608 = vmatprep.subr.mxu0 0.0
        %609 = vmatpush2.msra.mxu0 0.0
        %610 = vmatprep.subr.mxu0 0.0
        %611 = vmatpush2.msra.mxu0 0.0
        %612 = vmatprep.subr.mxu0 0.0
        %613 = vmatpush2.msra.mxu0 0.0
        %614 = vmatprep.subr.mxu0 0.0
        %615 = vmatpush2.msra.mxu0 0.0
        %616 = vmatprep.subr.mxu0 0.0
        %617 = vmatpush2.msra.mxu0 0.0
        %618 = vmatprep.subr.mxu0 0.0
        %619 = vmatpush2.msra.mxu0 0.0
        %620 = vmatprep.subr.mxu0 0.0
        %621 = vmatpush2.msra.mxu0 0.0
        %622 = vmatprep.subr.mxu0 0.0
        %623 = vmatpush2.msra.mxu0 0.0
        %624 = vmatprep.subr.mxu0 0.0
        %625 = vmatpush2.msra.mxu0 0.0
        %626 = vmatprep.subr.mxu0 0.0
        %627 = vmatpush2.msra.mxu0 0.0
        %628 = vmatprep.subr.mxu0 0.0
        %629 = vmatpush2.msra.mxu0 0.0
        %630 = vmatprep.mubr.f32.mxu0 0.0
        %631 = vmatmul.mubr.f32.gmra.mxu0 %v564
        %v632 = vpop.f32.mrf.mxu0
        %v633 = vadd.f32 %v561, %v632
        %v634 = vpop.f32.mrf.mxu0
        %635 = vdwg.mxu0
        %v636 = vld [vmem:[%s4] sm:$0x1]
        %v638 = vlaneseq
        %v639 = vshrl.u32 %v638, 7
        %v640 = vsub.s32 0, %v639
        %v641 = vrot.slane %v636, %v640
        %v643 = vadd.f32 %v633, %v641
        %v644 = vadd.f32 %v334, %v643
        %v645 = vmul.f32 %v644, %v644
        %647 = vrot.lane.b32.xlu0 %v645, 112
        %v648 = vpop.permute.xlu0 %647
        %v650 = vadd.f32 %v645, %v648
        %v651 = vrsqrt.pop %v650
        %653 = vrot.lane.b32.xlu0 %v651, 16
        %v654 = vpop.permute.xlu0 %653
        %v656 = vsel %vm400, %v651, %v654
        %v657 = vmul.f32 %v644, %v656
        %vm658 = vcmask 254976
        %659 = vst.msk [vmem:[#allocation10] sm:$0x3] %vm658, %v657
        // Predicated region
        $region69: #{tpu_custom_call.1} parent=47 // pred_check
          %p660 = pneg %p189
        $region70: #{tpu_custom_call.1} parent=47 // pred_check_branch
          %662 = sbr.rel (%p660) target = $region72
        $region71: #{tpu_custom_call.1} parent=47 // pred_region
          %s664 = ssub.s32 32, 32
          %665 = vsyncadd [#allocation4], %s664
          %s667 = sshll.u32 [#allocation10], 4
          %s668 = int_to_ptr.vmem [resolvable:$true] %s667
          %670 = dma.vmem_to_hbm [thread:$0]  %s668, 32, %s7, [#allocation4]
        $region72: #{tpu_custom_call.1} parent=47 // pred_fallthru
          _
        // Predicated region
        $region73: #{tpu_custom_call.1} parent=47 // pred_check
          %p671 = pneg %p189
        $region74: #{tpu_custom_call.1} parent=47 // pred_check_branch
          %673 = sbr.rel (%p671) target = $region76
        $region75: #{tpu_custom_call.1} parent=47 // pred_region
          %674 = dma.done [#allocation4], 32
        $region76: #{tpu_custom_call.1} parent=47 // pred_fallthru
          _
      $region48: #{tpu_custom_call.1} parent=5 // pred_fallthru
        _
      %p675 = scmp.le.s32.totalorder 2, %s19
      // Predicated region
      $region77: #{tpu_custom_call.1} parent=5 // pred_check
        %p676 = pneg %p675
      $region78: #{tpu_custom_call.1} parent=5 // pred_check_branch
        %678 = sbr.rel (%p676) target = $region80
      $region79: #{tpu_custom_call.1} parent=5 // pred_region
        %s679 = ssub.s32 %s19, 2
      $region80: #{tpu_custom_call.1} parent=5 // pred_fallthru
        _
    $region6: #{tpu_custom_call.1} parent=1 // loop_footer
      %s23 = sadd.s32 1, %s19
    $region7: #{tpu_custom_call.1} parent=1 // loop_footer_branch
      %18 = sbr.rel target = $region3
    $region8: #{tpu_custom_call.1} parent=1 // loop_exit
      _
    %680 = vsyncpa [#allocation3], 1
    %s681 = scalar_lea.sflag [#allocation3], 1
    %682 = vsyncpa %s681, 1
    %683 = vsyncpa [#allocation6], 1
    %684 = vsyncpa [#allocation9], 1
    %685 = vsyncpa [#allocation4], 1
    %s686 = scalar_lea.sflag [#allocation4], 1
    %687 = vsyncpa %s686, 1

</llo_original>
